<compile_context>
chip_gen: v6e
topology: v6e:2x2x1
jax: 0.10.0
libtpu: 0.0.40
codegen_flags: <defaults>
</compile_context>

<pallas_src>
import functools
import math

import jax
import jax.numpy as jnp
from jax.experimental import pallas as pl
from jax.experimental.pallas import tpu as pltpu

_LANE = 128


def _round_up(x, m):
    return (x + m - 1) // m * m


def _padded_bytes(shape, dtype):
    """Conservative VMEM bytes for one buffer of `shape` ((8,128)-tile padded)."""
    s = list(shape)
    if len(s) >= 2:
        s[-2] = _round_up(s[-2], 8)
    s[-1] = _round_up(max(s[-1], 1), _LANE)
    return math.prod(s) * jnp.dtype(dtype).itemsize


def _vmem_limit_bytes(block_footprint_bytes):
    """Explicit scoped-VMEM limit: actual footprint + headroom, clamped to chip."""
    try:
        cap = int(pltpu.get_tpu_info().vmem_capacity_bytes)
    except Exception:
        cap = 64 << 20          # v7x per-core VMEM (smallest current generation)
    want = block_footprint_bytes + (4 << 20)   # headroom for Mosaic-internal scratch
    return int(min(max(want, 32 << 20), cap - (16 << 20)))


# --------------------------------------------------------------------------- #
# Kernels
# --------------------------------------------------------------------------- #
def _layer_kernel(*refs, has_in_norm, emit_stats, mask_rows, n_true, tile_m):
    """One fused MLP layer step on a (batch-tile, K-chunk) grid point.

    If has_in_norm: a = relu(z_prev * scale + shift)   (single FMA + max)
    Always:         acc += a_bf16 @ W_chunk            (fp32 MXU accumulation)
    At the last K step: write z (= acc) and per-tile (sum, sumsq) partials.
    """
    idx = 0
    if has_in_norm:
        scale_ref, shift_ref = refs[idx], refs[idx + 1]
        idx += 2
    a_ref, w_ref = refs[idx], refs[idx + 1]
    idx += 2
    z_ref = refs[idx]
    idx += 1
    stats_ref = refs[idx] if emit_stats else None
    acc_ref = refs[-1]

    k = pl.program_id(1)

    @pl.when(k == 0)
    def _():
        acc_ref[...] = jnp.zeros_like(acc_ref)

    if has_in_norm:
        # Previous layer's BatchNorm + affine + ReLU folded into one FMA.
        a = a_ref[...].astype(jnp.float32) * scale_ref[...] + shift_ref[...]
        a = jnp.maximum(a, 0.0).astype(jnp.bfloat16)
    else:
        # First layer: fp32 -> bf16 cast happens here, after the block load.
        a = a_ref[...].astype(jnp.bfloat16)

    acc_ref[...] += jnp.dot(a, w_ref[...], preferred_element_type=jnp.float32)

    @pl.when(k == pl.num_programs(1) - 1)
    def _():
        z = acc_ref[...]
        z_ref[...] = z.astype(z_ref.dtype)
        if emit_stats:
            if mask_rows:
                # Exclude zero-padded batch rows from the statistics.
                rows = (jax.lax.broadcasted_iota(jnp.int32, (tile_m, 1), 0)
                        + pl.program_id(0) * tile_m)
                z = jnp.where(rows < n_true, z, 0.0)
            s = jnp.sum(z, axis=0, keepdims=True)
            sq = jnp.sum(z * z, axis=0, keepdims=True)
            stats_ref[...] = jnp.concatenate([s, sq], axis=0)[None]


def _affine_kernel(scale_ref, shift_ref, z_ref, o_ref):
    """Final affine=False BatchNorm: out = z * scale + shift (one FMA pass)."""
    o_ref[...] = (z_ref[...].astype(jnp.float32) * scale_ref[...]
                  + shift_ref[...]).astype(o_ref.dtype)


# --------------------------------------------------------------------------- #
# pallas_call wrappers
# --------------------------------------------------------------------------- #
def _layer_call(a, w_p, in_scale, in_shift, *, emit_stats, z_dtype,
                n_true, tile_m, tile_k):
    n_pad, d_in_p = a.shape
    d_out_p = w_p.shape[1]
    n_m = n_pad // tile_m
    n_k = d_in_p // tile_k
    has_in_norm = in_scale is not None
    mask_rows = n_pad != n_true

    operands, in_specs = [], []
    if has_in_norm:
        operands += [in_scale, in_shift]
        in_specs += [pl.BlockSpec((1, tile_k), lambda i, k: (0, k)),
                     pl.BlockSpec((1, tile_k), lambda i, k: (0, k))]
    operands += [a, w_p]
    in_specs += [pl.BlockSpec((tile_m, tile_k), lambda i, k: (i, k)),
                 pl.BlockSpec((tile_k, d_out_p), lambda i, k: (k, 0))]

    out_shape = [jax.ShapeDtypeStruct((n_pad, d_out_p), z_dtype)]
    out_specs = [pl.BlockSpec((tile_m, d_out_p), lambda i, k: (i, 0))]
    if emit_stats:
        out_shape.append(jax.ShapeDtypeStruct((n_m, 2, d_out_p), jnp.float32))
        out_specs.append(pl.BlockSpec((1, 2, d_out_p), lambda i, k: (i, 0, 0)))

    # Double-buffered blocks + fp32 accumulator scratch.
    blocks = [((1, tile_k), jnp.float32)] * (2 if has_in_norm else 0)
    blocks += [((tile_m, tile_k), a.dtype), ((tile_k, d_out_p), w_p.dtype),
               ((tile_m, d_out_p), z_dtype)]
    if emit_stats:
        blocks.append(((1, 2, d_out_p), jnp.float32))
    footprint = 2 * sum(_padded_bytes(s, d) for s, d in blocks)
    footprint += _padded_bytes((tile_m, d_out_p), jnp.float32)

    kernel = functools.partial(_layer_kernel, has_in_norm=has_in_norm,
                               emit_stats=emit_stats, mask_rows=mask_rows,
                               n_true=n_true, tile_m=tile_m)

    return pl.pallas_call(
        kernel,
        out_shape=out_shape,
        grid=(n_m, n_k),
        in_specs=in_specs,
        out_specs=out_specs,
        scratch_shapes=[pltpu.VMEM((tile_m, d_out_p), jnp.float32)],
        compiler_params=pltpu.CompilerParams(
            dimension_semantics=("parallel", "arbitrary"),
            vmem_limit_bytes=_vmem_limit_bytes(footprint)),
    )(*operands)


def _affine_call(z, scale, shift, out_dtype, tile_m):
    n_pad, d_p = z.shape
    n_m = n_pad // tile_m
    blocks = ([((1, d_p), jnp.float32)] * 2
              + [((tile_m, d_p), z.dtype), ((tile_m, d_p), out_dtype)])
    footprint = 2 * sum(_padded_bytes(s, d) for s, d in blocks)
    return pl.pallas_call(
        _affine_kernel,
        out_shape=jax.ShapeDtypeStruct((n_pad, d_p), out_dtype),
        grid=(n_m,),
        in_specs=[pl.BlockSpec((1, d_p), lambda i: (0, 0)),
                  pl.BlockSpec((1, d_p), lambda i: (0, 0)),
                  pl.BlockSpec((tile_m, d_p), lambda i: (i, 0))],
        out_specs=pl.BlockSpec((tile_m, d_p), lambda i: (i, 0)),
        compiler_params=pltpu.CompilerParams(
            dimension_semantics=("parallel",),
            vmem_limit_bytes=_vmem_limit_bytes(footprint)),
    )(scale, shift, z)


# --------------------------------------------------------------------------- #
# Parameter prep + forward
# --------------------------------------------------------------------------- #
def prepare_params(params):
    """ONE-TIME conversion of PyTorch-layout params into kernel-ready form.

    params: list of (w[out_features, in_features] f32, gamma[out], beta[out]).
    Weights are transposed to (in, out), zero-padded to 128-lane multiples and
    cast to bf16 here, so the per-call forward never touches fp32 weights.
    """
    prepared = {"w": [], "gamma": [], "beta": [], "d_in": [], "d_out": []}
    for w, gamma, beta in params:
        d_out, d_in = w.shape
        d_in_p, d_out_p = _round_up(d_in, _LANE), _round_up(d_out, _LANE)
        w_t = jnp.pad(w.T.astype(jnp.bfloat16),
                      ((0, d_in_p - d_in), (0, d_out_p - d_out)))
        # Zero-padded gamma/beta keep padded feature columns exactly zero
        # through BN; the next layer's padded weight rows are zero too, so
        # padding never leaks into real features.
        g = jnp.pad(gamma.reshape(1, -1).astype(jnp.float32),
                    ((0, 0), (0, d_out_p - d_out)))
        b = jnp.pad(beta.reshape(1, -1).astype(jnp.float32),
                    ((0, 0), (0, d_out_p - d_out)))
        prepared["w"].append(w_t)
        prepared["gamma"].append(g)
        prepared["beta"].append(b)
        prepared["d_in"].append(d_in)
        prepared["d_out"].append(d_out)
    return prepared


def mlp_forward(prepared, x, *, last_bn=True, eps=1e-5,
                tile_m=256, tile_k=512, out_dtype=None):
    """MoCo MLP head forward (Linear(no bias) -> BN -> ReLU ... -> BN(affine=False)).

    tile_m: batch rows per grid step (256 feeds the v6e/v7x 256x256 MXU; use
            128 on v5e).  tile_k: K-streaming chunk size of each weight.
    """
    weights = prepared["w"]
    n_layers = len(weights)
    n_true, d_in = x.shape
    out_dtype = x.dtype if out_dtype is None else out_dtype

    d_in_p = weights[0].shape[0]
    tile_m = min(tile_m, _round_up(n_true, 8))
    n_pad = _round_up(n_true, tile_m)

    # Zero-pad x to padded batch/feature extents.  At production sizes this is
    # a no-op; the fp32->bf16 cast happens inside the kernel, not here.
    a = x
    if (n_pad, d_in_p) != (n_true, d_in):
        a = jnp.pad(x, ((0, n_pad - n_true), (0, d_in_p - d_in)))

    in_scale = in_shift = None
    for layer in range(n_layers):
        w_p = weights[layer]
        is_last = layer == n_layers - 1
        apply_bn = (not is_last) or last_bn

        tk = min(tile_k, w_p.shape[0])
        while w_p.shape[0] % tk:
            tk -= _LANE

        z_dtype = out_dtype if (is_last and not apply_bn) else jnp.bfloat16
        res = _layer_call(a, w_p, in_scale, in_shift, emit_stats=apply_bn,
                          z_dtype=z_dtype, n_true=n_true,
                          tile_m=tile_m, tile_k=tk)
        a = res[0]

        if apply_bn:
            # Tiny per-feature reduction of the per-tile partials; BN(+affine)
            # folded into one scale/shift FMA applied by the next kernel.
            totals = jnp.sum(res[1], axis=0)                # (2, d_out_p)
            mean = totals[0] / n_true
            var = jnp.maximum(totals[1] / n_true - mean * mean, 0.0)
            inv = jax.lax.rsqrt(var + eps)
            if not is_last:
                scale = prepared["gamma"][layer][0] * inv
                shift = prepared["beta"][layer][0] - mean * scale
            else:                                           # affine=False BN
                scale = inv
                shift = -mean * inv
            in_scale = scale.reshape(1, -1)
            in_shift = shift.reshape(1, -1)
        else:
            in_scale = in_shift = None

    out = _affine_call(a, in_scale, in_shift, out_dtype, tile_m) if last_bn else a
    return out[:n_true, :prepared["d_out"][-1]]


# --------------------------------------------------------------------------- #
# Init + pure-JAX references
# --------------------------------------------------------------------------- #
def init_mlp_params(key, num_layers, input_dim, mlp_dim, output_dim):
    """Deterministic init mirroring nn.Linear(bias=False) + nn.BatchNorm1d."""
    params = []
    for layer in range(num_layers):
        d1 = input_dim if layer == 0 else mlp_dim
        d2 = output_dim if layer == num_layers - 1 else mlp_dim
        key, wk = jax.random.split(key)
        bound = 1.0 / math.sqrt(d1)
        w = jax.random.uniform(wk, (d2, d1), jnp.float32, -bound, bound)
        params.append((w, jnp.ones((d2,), jnp.float32),
                       jnp.zeros((d2,), jnp.float32)))
    return params


def mlp_forward_ref(params, x, last_bn=True, eps=1e-5, match_kernel=False):
    """Reference forward.  match_kernel=True mirrors the kernel numerics
    (bf16 matmul operands, bf16 intermediate storage, fp32 BN statistics)."""
    n = len(params)
    y = x
    for i, (w, gamma, beta) in enumerate(params):
        is_last = i == n - 1
        if match_kernel:
            z = jnp.dot(y.astype(jnp.bfloat16), w.T.astype(jnp.bfloat16),
                        preferred_element_type=jnp.float32)
        else:
            z = jnp.dot(y, w.T)
        apply_bn = (not is_last) or last_bn
        if apply_bn:
            mean = jnp.mean(z, axis=0, keepdims=True)
            if match_kernel:
                var = jnp.maximum(jnp.mean(z * z, axis=0, keepdims=True)
                                  - mean * mean, 0.0)
                z = z.astype(jnp.bfloat16).astype(jnp.float32)
            else:
                var = jnp.mean(jnp.square(z - mean), axis=0, keepdims=True)
            inv = jax.lax.rsqrt(var + eps)
            if is_last:
                scale, shift = inv, -mean * inv
            else:
                scale = gamma[None, :] * inv
                shift = beta[None, :] - mean * scale
            y = z * scale + shift
        else:
            y = z
        if not is_last:
            y = jnp.maximum(y, 0.0)
    return y


if __name__ == "__main__":
    num_layers = 3
    batch = 16
    input_dim, mlp_dim, output_dim = 32, 64, 32

    key = jax.random.PRNGKey(0)
    key, xk = jax.random.split(key)
    x = jax.random.normal(xk, (batch, input_dim), jnp.float32)

    params = init_mlp_params(key, num_layers, input_dim, mlp_dim, output_dim)
    prepared = prepare_params(params)   # one-time padded / transposed / bf16 prep

    # --- last_bn=True (default MoCo head) ---------------------------------- #
    out = mlp_forward(prepared, x, last_bn=True)
    out = jax.block_until_ready(out)
    assert out.shape == (batch, output_dim), out.shape

    ref_match = mlp_forward_ref(params, x, last_bn=True, match_kernel=True)
    assert jnp.allclose(out, ref_match, atol=5e-3, rtol=5e-3), (
        float(jnp.max(jnp.abs(out - ref_match))))

    ref_f32 = mlp_forward_ref(params, x, last_bn=True, match_kernel=False)
    assert jnp.allclose(out, ref_f32, atol=1e-1, rtol=1e-1), (
        float(jnp.max(jnp.abs(out - ref_f32))))

    # --- last_bn=False path -------------------------------------------------#
    out2 = jax.block_until_ready(mlp_forward(prepared, x, last_bn=False))
    ref2 = mlp_forward_ref(params, x, last_bn=False, match_kernel=True)
    assert out2.shape == (batch, output_dim)
    assert jnp.allclose(out2, ref2, atol=5e-3, rtol=5e-3), (
        float(jnp.max(jnp.abs(out2 - ref2))))

    print("KERNEL_OK")
</pallas_src>

<mosaic_0001>
module attributes {stable_mosaic.version = 11 : i64} {
  func.func @_layer_kernel(%arg0: i32, %arg1: i32, %arg2: memref<16x128xf32, #tpu.memory_space<vmem>>, %arg3: memref<128x128xbf16, #tpu.memory_space<vmem>>, %arg4: memref<16x128xbf16, #tpu.memory_space<vmem>>, %arg5: memref<1x2x128xf32, #tpu.memory_space<vmem>>, %arg6: memref<16x128xf32, #tpu.memory_space<vmem>>) attributes {dimension_semantics = [#tpu.dimension_semantics<parallel>, #tpu.dimension_semantics<arbitrary>], iteration_bounds = array<i64: 1, 1>, scalar_prefetch = 0 : i64, scratch_operands = 1 : i64, tpu.core_type = #tpu.core_type<tc>, window_params = [{transform_indices = @transform_0, window_bounds = array<i64: 16, 128>}, {transform_indices = @transform_1, window_bounds = array<i64: 128, 128>}, {transform_indices = @transform_2, window_bounds = array<i64: 16, 128>}, {transform_indices = @transform_3, window_bounds = array<i64: 1, 2, 128>}]} {
    %c0_i32 = arith.constant 0 : i32
    %0 = arith.cmpi eq, %arg1, %c0_i32 : i32
    %1 = arith.extui %0 : i1 to i32
    %c0_i32_0 = arith.constant 0 : i32
    %2 = arith.cmpi ne, %1, %c0_i32_0 : i32
    scf.if %2 {
      %cst_10 = arith.constant 0.000000e+00 : f32
      %13 = vector.broadcast %cst_10 : f32 to vector<16x128xf32>
      %c0_11 = arith.constant 0 : index
      %c0_12 = arith.constant 0 : index
      %14 = vector.load %arg6[%c0_11, %c0_12] : memref<16x128xf32, #tpu.memory_space<vmem>>, vector<16x128xf32>
      tpu.vector_store %arg6[%c0_11, %c0_12], %13 {strides = array<i32>} : memref<16x128xf32, #tpu.memory_space<vmem>>, vector<16x128xf32>,
    } else {
    }
    %c0 = arith.constant 0 : index
    %c0_1 = arith.constant 0 : index
    %3 = vector.load %arg2[%c0, %c0_1] : memref<16x128xf32, #tpu.memory_space<vmem>>, vector<16x128xf32>
    %4 = arith.truncf %3 : vector<16x128xf32> to vector<16x128xbf16>
    %c0_2 = arith.constant 0 : index
    %c0_3 = arith.constant 0 : index
    %5 = vector.load %arg6[%c0_2, %c0_3] : memref<16x128xf32, #tpu.memory_space<vmem>>, vector<16x128xf32>
    %c0_4 = arith.constant 0 : index
    %c0_5 = arith.constant 0 : index
    %6 = vector.load %arg3[%c0_4, %c0_5] : memref<128x128xbf16, #tpu.memory_space<vmem>>, vector<128x128xbf16>
    %cst = arith.constant dense<0.000000e+00> : vector<16x128xf32>
    %7 = tpu.matmul %4, %6, %cst {dimension_numbers = #tpu.dot_dimension_numbers<[1], [0], [0], [1], [0, 0, 1, 1], [], []>} : vector<16x128xbf16>, vector<128x128xbf16>, vector<16x128xf32> -> vector<16x128xf32>
    %8 = arith.addf %5, %7 : vector<16x128xf32>
    %c0_6 = arith.constant 0 : index
    %c0_7 = arith.constant 0 : index
    %9 = vector.load %arg6[%c0_6, %c0_7] : memref<16x128xf32, #tpu.memory_space<vmem>>, vector<16x128xf32>
    tpu.vector_store %arg6[%c0_6, %c0_7], %8 {strides = array<i32>} : memref<16x128xf32, #tpu.memory_space<vmem>>, vector<16x128xf32>,
    %c0_i32_8 = arith.constant 0 : i32
    %10 = arith.cmpi eq, %arg1, %c0_i32_8 : i32
    %11 = arith.extui %10 : i1 to i32
    %c0_i32_9 = arith.constant 0 : i32
    %12 = arith.cmpi ne, %11, %c0_i32_9 : i32
    scf.if %12 {
      %c0_10 = arith.constant 0 : index
      %c0_11 = arith.constant 0 : index
      %13 = vector.load %arg6[%c0_10, %c0_11] : memref<16x128xf32, #tpu.memory_space<vmem>>, vector<16x128xf32>
      %14 = arith.truncf %13 : vector<16x128xf32> to vector<16x128xbf16>
      %c0_12 = arith.constant 0 : index
      %c0_13 = arith.constant 0 : index
      %15 = vector.load %arg4[%c0_12, %c0_13] : memref<16x128xbf16, #tpu.memory_space<vmem>>, vector<16x128xbf16>
      tpu.vector_store %arg4[%c0_12, %c0_13], %14 {strides = array<i32>} : memref<16x128xbf16, #tpu.memory_space<vmem>>, vector<16x128xbf16>,
      %cst_14 = arith.constant dense<0.000000e+00> : vector<128xf32>
      %16 = vector.multi_reduction <add>, %13, %cst_14 [0] : vector<16x128xf32> to vector<128xf32>
      %17 = vector.shape_cast %16 : vector<128xf32> to vector<1x128xf32>
      %18 = arith.mulf %13, %13 : vector<16x128xf32>
      %cst_15 = arith.constant dense<0.000000e+00> : vector<128xf32>
      %19 = vector.multi_reduction <add>, %18, %cst_15 [0] : vector<16x128xf32> to vector<128xf32>
      %20 = vector.shape_cast %19 : vector<128xf32> to vector<1x128xf32>
      %21 = tpu.concatenate %17, %20 in 0 : vector<1x128xf32>, vector<1x128xf32> -> vector<2x128xf32>
      %22 = vector.shape_cast %21 : vector<2x128xf32> to vector<1x2x128xf32>
      %c0_16 = arith.constant 0 : index
      %c0_17 = arith.constant 0 : index
      %c0_18 = arith.constant 0 : index
      %23 = vector.load %arg5[%c0_16, %c0_17, %c0_18] : memref<1x2x128xf32, #tpu.memory_space<vmem>>, vector<1x2x128xf32>
      tpu.vector_store %arg5[%c0_16, %c0_17, %c0_18], %22 {strides = array<i32>} : memref<1x2x128xf32, #tpu.memory_space<vmem>>, vector<1x2x128xf32>,
    } else {
    }
    return
  }
  func.func @transform_0(%arg0: i32, %arg1: i32) -> (i32, i32) {
    %c0_i32 = arith.constant 0 : i32
    return %arg0, %arg1 : i32, i32
  }
  func.func @transform_1(%arg0: i32, %arg1: i32) -> (i32, i32) {
    %c0_i32 = arith.constant 0 : i32
    %c0_i32_0 = arith.constant 0 : i32
    return %arg1, %c0_i32 : i32, i32
  }
  func.func @transform_2(%arg0: i32, %arg1: i32) -> (i32, i32) {
    %c0_i32 = arith.constant 0 : i32
    %c0_i32_0 = arith.constant 0 : i32
    return %arg0, %c0_i32 : i32, i32
  }
  func.func @transform_3(%arg0: i32, %arg1: i32) -> (i32, i32, i32) {
    %c0_i32 = arith.constant 0 : i32
    %c0_i32_0 = arith.constant 0 : i32
    %c0_i32_1 = arith.constant 0 : i32
    return %arg0, %c0_i32, %c0_i32_0 : i32, i32, i32
  }
}

</mosaic_0001>

<llo_original>
// kernel: tpu_custom_call.1
$region0: #{tpu_custom_call.1}
  #allocation0 [shape = 'u32[]', space=smem, size = 0x4, offset = 0x4, fixed_abs, tag = 'smem constant byte address 0x4 - core index']
  #allocation1 [shape = 'u32[144,128]{1,0:T(1,128)}', space=vmem, size = 0x12000, scoped, tag = 'internal scratch']
  #allocation2 [shape = 'f32[16,128]{1,0:T(8,128)}', space=vmem, size = 0x2000, scoped, tag = 'scratch operand']
  %s0 = inlined_call_operand.hbm [shape: f32[16,128], index: 0, kind: input, shape index: {}]
  %s1 = inlined_call_operand.hbm [shape: bf16[128,128], index: 1, kind: input, shape index: {}]
  %s2 = inlined_call_operand.hbm [shape: bf16[16,128], index: 2, kind: output, shape index: {0}]
  %s3 = inlined_call_operand.hbm [shape: f32[1,2,128], index: 3, kind: output, shape index: {1}]
  %4 = xla_tuple %s2, %s3
  %s5 = sld [smem:[#allocation0]]
  $region42: #{tpu_custom_call.1} parent=0
    _
  %s7 = ssub.s32 1, %s5
  %s8 = scalar_select 0, %s7, %s5
  $region1: #{tpu_custom_call.1} parent=0
    #allocation3 [shape = 'u8[8192]{0}', space=vmem, size = 0x2000, scoped, tag = 'input window, operand 0, single buffered']
    #allocation4 [shape = 's32[1]{0}', space=sflag, size = 0x4, scoped, tag = 'scoped memory for tpu_custom_call.1']
    #allocation5 [shape = 's32[1]{0}', space=sflag, size = 0x4, scoped, tag = 'scoped memory for tpu_custom_call.1']
    #allocation6 [shape = 'u8[32768]{0}', space=vmem, size = 0x8000, scoped, tag = 'input window, operand 1, single buffered']
    #allocation7 [shape = 's32[1]{0}', space=sflag, size = 0x4, scoped, tag = 'scoped memory for tpu_custom_call.1']
    #allocation8 [shape = 'u8[4096]{0}', space=vmem, size = 0x1000, scoped, tag = 'output window, operand 0, single buffered']
    #allocation9 [shape = 'u8[1024]{0}', space=vmem, size = 0x400, scoped, tag = 'output window, operand 1, single buffered']
    #allocation10 [shape = 's32[1]{0}', space=sflag, size = 0x4, scoped, tag = 'scoped memory for tpu_custom_call.1']
    %9 = vsyncpa [#allocation4], 0
    %10 = vsyncpa [#allocation7], 0
    %11 = vsyncpa [#allocation5], 0
    %12 = vsyncpa [#allocation10], 0
    // Predicated region
    $region2: #{tpu_custom_call.1} parent=1 // pred_check
      _
    $region3: #{tpu_custom_call.1} parent=1 // pred_check_branch
      %14 = sbr.rel (0) target = $region5
    $region4: #{tpu_custom_call.1} parent=1 // pred_region
      %s16 = ssub.s32 256, 256
      %17 = vsyncadd [#allocation4], %s16
      %s18 = sshll.u32 [#allocation3], 4
      %s19 = int_to_ptr.vmem [resolvable:$true] %s18
      %24 = dma.hbm_to_vmem [thread:$0]  %s0, 256, %s19, [#allocation4], 128, 128, 8
    $region5: #{tpu_custom_call.1} parent=1 // pred_fallthru
      _
    // Predicated region
    $region6: #{tpu_custom_call.1} parent=1 // pred_check
      _
    $region7: #{tpu_custom_call.1} parent=1 // pred_check_branch
      %26 = sbr.rel (0) target = $region9
    $region8: #{tpu_custom_call.1} parent=1 // pred_region
      %s28 = ssub.s32 1024, 1024
      %29 = vsyncadd [#allocation7], %s28
      %s30 = sshll.u32 [#allocation6], 4
      %s31 = int_to_ptr.vmem [resolvable:$true] %s30
      %36 = dma.hbm_to_vmem [thread:$0]  %s1, 1024, %s31, [#allocation7], 64, 64, 4
    $region9: #{tpu_custom_call.1} parent=1 // pred_fallthru
      _
    // Predicated region
    $region10: #{tpu_custom_call.1} parent=1 // pred_check
      _
    $region11: #{tpu_custom_call.1} parent=1 // pred_check_branch
      %38 = sbr.rel (0) target = $region13
    $region12: #{tpu_custom_call.1} parent=1 // pred_region
      %39 = dma.done [#allocation4], 256
    $region13: #{tpu_custom_call.1} parent=1 // pred_fallthru
      _
    // Predicated region
    $region14: #{tpu_custom_call.1} parent=1 // pred_check
      _
    $region15: #{tpu_custom_call.1} parent=1 // pred_check_branch
      %41 = sbr.rel (0) target = $region17
    $region16: #{tpu_custom_call.1} parent=1 // pred_region
      %42 = dma.done [#allocation7], 1024
    $region17: #{tpu_custom_call.1} parent=1 // pred_fallthru
      _
    %p44 = scmp.eq.s32.totalorder 0, 0
    // Predicated region
    $region18: #{tpu_custom_call.1} parent=1 // pred_check
      %p45 = pneg %p44
    $region19: #{tpu_custom_call.1} parent=1 // pred_check_branch
      %47 = sbr.rel (%p45) target = $region21
    $region20: #{tpu_custom_call.1} parent=1 // pred_region
      %48 = vst [vmem:[#allocation2] sm:$0xff] 0.0
      %49 = vst [vmem:[#allocation2 + $0x8] sm:$0xff] 0.0
    $region21: #{tpu_custom_call.1} parent=1 // pred_fallthru
      _
    %v50 = vld [vmem:[#allocation3] sm:$0xff]
    %v51 = vld [vmem:[#allocation3 + $0x8] sm:$0xff]
    %v52 = vpack.c.bf16 %v51, %v50
    %v53 = vld [vmem:[#allocation2] sm:$0xff]
    %v54 = vld [vmem:[#allocation2 + $0x8] sm:$0xff]
    %v55 = vld [vmem:[#allocation6] sm:$0xf]
    %v56 = vld [vmem:[#allocation6 + $0x4] sm:$0xf]
    %v57 = vld [vmem:[#allocation6 + $0x8] sm:$0xf]
    %v58 = vld [vmem:[#allocation6 + $0xc] sm:$0xf]
    %v59 = vld [vmem:[#allocation6 + $0x10] sm:$0xf]
    %v60 = vld [vmem:[#allocation6 + $0x14] sm:$0xf]
    %v61 = vld [vmem:[#allocation6 + $0x18] sm:$0xf]
    %v62 = vld [vmem:[#allocation6 + $0x1c] sm:$0xf]
    %v63 = vld [vmem:[#allocation6 + $0x20] sm:$0xf]
    %v64 = vld [vmem:[#allocation6 + $0x24] sm:$0xf]
    %v65 = vld [vmem:[#allocation6 + $0x28] sm:$0xf]
    %v66 = vld [vmem:[#allocation6 + $0x2c] sm:$0xf]
    %v67 = vld [vmem:[#allocation6 + $0x30] sm:$0xf]
    %v68 = vld [vmem:[#allocation6 + $0x34] sm:$0xf]
    %v69 = vld [vmem:[#allocation6 + $0x38] sm:$0xf]
    %v70 = vld [vmem:[#allocation6 + $0x3c] sm:$0xf]
    %v87 = vunpack.c.l.b16 %v55
    %v88 = vunpack.c.l.b16 %v56
    %v89 = vunpack.c.l.b16 %v57
    %v90 = vunpack.c.l.b16 %v58
    %v91 = vunpack.c.l.b16 %v59
    %v92 = vunpack.c.l.b16 %v60
    %v93 = vunpack.c.l.b16 %v61
    %v94 = vunpack.c.l.b16 %v62
    %v95 = vunpack.c.l.b16 %v63
    %v96 = vunpack.c.l.b16 %v64
    %v97 = vunpack.c.l.b16 %v65
    %v98 = vunpack.c.l.b16 %v66
    %v99 = vunpack.c.l.b16 %v67
    %v100 = vunpack.c.l.b16 %v68
    %v101 = vunpack.c.l.b16 %v69
    %v102 = vunpack.c.l.b16 %v70
    %v103 = vpack.c.b16 %v88, %v87
    %v104 = vpack.c.b16 %v90, %v89
    %v105 = vpack.c.b16 %v92, %v91
    %v106 = vpack.c.b16 %v94, %v93
    %v107 = vpack.c.b16 %v96, %v95
    %v108 = vpack.c.b16 %v98, %v97
    %v109 = vpack.c.b16 %v100, %v99
    %v110 = vpack.c.b16 %v102, %v101
    %119 = vmatprep.subr.bf16.mxu0 0
    %120 = vmatpush1.bf16.msra.mxu0 %v110
    %121 = vmatprep.subr.bf16.mxu0 0
    %122 = vmatpush1.bf16.msra.mxu0 %v109
    %123 = vmatprep.subr.bf16.mxu0 0
    %124 = vmatpush1.bf16.msra.mxu0 %v108
    %125 = vmatprep.subr.bf16.mxu0 0
    %126 = vmatpush1.bf16.msra.mxu0 %v107
    %127 = vmatprep.subr.bf16.mxu0 0
    %128 = vmatpush1.bf16.msra.mxu0 %v106
    %129 = vmatprep.subr.bf16.mxu0 0
    %130 = vmatpush1.bf16.msra.mxu0 %v105
    %131 = vmatprep.subr.bf16.mxu0 0
    %132 = vmatpush1.bf16.msra.mxu0 %v104
    %133 = vmatprep.subr.bf16.mxu0 0
    %134 = vmatpush1.bf16.msra.mxu0 %v103
    %135 = vmatprep.subr.bf16.mxu0 0
    %136 = vmatpush2.bf16.msra.mxu0 0
    %137 = vmatprep.subr.bf16.mxu0 0
    %138 = vmatpush2.bf16.msra.mxu0 0
    %139 = vmatprep.subr.bf16.mxu0 0
    %140 = vmatpush2.bf16.msra.mxu0 0
    %141 = vmatprep.subr.bf16.mxu0 0
    %142 = vmatpush2.bf16.msra.mxu0 0
    %143 = vmatprep.subr.bf16.mxu0 0
    %144 = vmatpush2.bf16.msra.mxu0 0
    %145 = vmatprep.subr.bf16.mxu0 0
    %146 = vmatpush2.bf16.msra.mxu0 0
    %147 = vmatprep.subr.bf16.mxu0 0
    %148 = vmatpush2.bf16.msra.mxu0 0
    %149 = vmatprep.subr.bf16.mxu0 0
    %150 = vmatpush2.bf16.msra.mxu0 0
    %151 = vmatprep.mubr.bf16.mxu0 0
    %152 = vmatmul.mubr.bf16.gmra.mxu0 %v52
    %v153 = vpop.f32.mrf.mxu0
    %v154 = vadd.f32 0.0, %v153
    %v155 = vpop.f32.mrf.mxu0
    %v156 = vpop.f32.mrf.mxu0
    %v157 = vadd.f32 0.0, %v156
    %v158 = vpop.f32.mrf.mxu0
    %159 = vdwg.mxu0
    %v160 = vadd.f32 %v53, %v154
    %v161 = vadd.f32 %v54, %v157
    %162 = vst [vmem:[#allocation2] sm:$0xff] %v160
    %163 = vst [vmem:[#allocation2 + $0x8] sm:$0xff] %v161
    // Predicated region
    $region22: #{tpu_custom_call.1} parent=1 // pred_check
      %p164 = pneg %p44
    $region23: #{tpu_custom_call.1} parent=1 // pred_check_branch
      %166 = sbr.rel (%p164) target = $region25
    $region24: #{tpu_custom_call.1} parent=1 // pred_region
      %v167 = vld [vmem:[#allocation2] sm:$0xff]
      %v168 = vld [vmem:[#allocation2 + $0x8] sm:$0xff]
      %v169 = vpack.c.bf16 %v168, %v167
      %v171 = vunpack.c.l.b16 %v169
      %v172 = vunpack.c.h.b16 %v169
      %v173 = vpack.c.b16 %v171, %v171
      %v174 = vpack.c.b16 %v172, %v172
      %177 = vst [vmem:[#allocation8] sm:$0xf] %v173
      %178 = vst [vmem:[#allocation8 + $0x4] sm:$0xf] %v174
      %v179 = vadd.f32 %v167, %v168
      %v180 = vrot.slane %v179, 4
      %v181 = vadd.f32 %v179, %v180
      %v182 = vrot.slane %v181, 2
      %v183 = vadd.f32 %v181, %v182
      %v184 = vrot.slane %v183, 1
      %v185 = vadd.f32 %v183, %v184
      %v186 = vmul.f32 %v167, %v167
      %v187 = vmul.f32 %v168, %v168
      %v188 = vadd.f32 %v186, %v187
      %v189 = vrot.slane %v188, 4
      %v190 = vadd.f32 %v188, %v189
      %v191 = vrot.slane %v190, 2
      %v192 = vadd.f32 %v190, %v191
      %v193 = vrot.slane %v192, 1
      %v194 = vadd.f32 %v192, %v193
      %vm195 = vcmask 1040384
      %v196 = vsel %vm195, %v185, %v194
      %197 = vst [vmem:[#allocation9] sm:$0x3] %v196
    $region25: #{tpu_custom_call.1} parent=1 // pred_fallthru
      _
    // Predicated region
    $region26: #{tpu_custom_call.1} parent=1 // pred_check
      _
    $region27: #{tpu_custom_call.1} parent=1 // pred_check_branch
      %199 = sbr.rel (0) target = $region29
    $region28: #{tpu_custom_call.1} parent=1 // pred_region
      %s201 = ssub.s32 128, 128
      %202 = vsyncadd [#allocation5], %s201
      %s203 = sshll.u32 [#allocation8], 4
      %s204 = int_to_ptr.vmem [resolvable:$true] %s203
      %209 = dma.vmem_to_hbm [thread:$0]  %s204, 128, %s2, [#allocation5], 64, 64, 4
    $region29: #{tpu_custom_call.1} parent=1 // pred_fallthru
      _
    // Predicated region
    $region30: #{tpu_custom_call.1} parent=1 // pred_check
      _
    $region31: #{tpu_custom_call.1} parent=1 // pred_check_branch
      %211 = sbr.rel (0) target = $region33
    $region32: #{tpu_custom_call.1} parent=1 // pred_region
      %s213 = ssub.s32 32, 32
      %214 = vsyncadd [#allocation10], %s213
      %s216 = sshll.u32 [#allocation9], 4
      %s217 = int_to_ptr.vmem [resolvable:$true] %s216
      %219 = dma.vmem_to_hbm [thread:$0]  %s217, 32, %s3, [#allocation10]
    $region33: #{tpu_custom_call.1} parent=1 // pred_fallthru
      _
    // Predicated region
    $region34: #{tpu_custom_call.1} parent=1 // pred_check
      _
    $region35: #{tpu_custom_call.1} parent=1 // pred_check_branch
      %221 = sbr.rel (0) target = $region37
    $region36: #{tpu_custom_call.1} parent=1 // pred_region
      %222 = dma.done [#allocation5], 128
    $region37: #{tpu_custom_call.1} parent=1 // pred_fallthru
      _
    // Predicated region
    $region38: #{tpu_custom_call.1} parent=1 // pred_check
      _
    $region39: #{tpu_custom_call.1} parent=1 // pred_check_branch
      %224 = sbr.rel (0) target = $region41
    $region40: #{tpu_custom_call.1} parent=1 // pred_region
      %225 = dma.done [#allocation10], 32
    $region41: #{tpu_custom_call.1} parent=1 // pred_fallthru
      _
    %226 = vsyncpa [#allocation4], 1
    %227 = vsyncpa [#allocation7], 1
    %228 = vsyncpa [#allocation5], 1
    %229 = vsyncpa [#allocation10], 1

</llo_original>
